<compile_context>
chip_gen: v6e
topology: v6e:2x2x1
jax: 0.10.0
libtpu: 0.0.40
codegen_flags: <defaults>
</compile_context>

<pallas_src>
import jax
import jax.numpy as jnp
from jax.experimental import pallas as pl
from jax.experimental.pallas import tpu as pltpu

EPS = 1e-6

# Tile budget for the streamed x/out blocks (double-buffered) plus ~2 f32
# working copies of the block.  24 MiB fits inside a 32 MiB scoped-VMEM limit,
# which is safe on v5e (128 MiB phys), v6e (128 MiB phys) and v7x (64 MiB phys).
_TILE_VMEM_BUDGET = 24 * 1024 * 1024
_VMEM_LIMIT_BYTES = 32 * 1024 * 1024
_MAX_ROW_TILE = 1024


def _layernorm_kernel(x_ref, beta_ref, gamma_ref, o_ref):
    # x_ref: (row_tile, F) block in VMEM.  beta/gamma: (1, F) f32, resident.
    x = x_ref[...].astype(jnp.float32)
    feat = x.shape[-1]
    mean = jnp.mean(x, axis=-1, keepdims=True)
    diff = x - mean
    # Unbiased variance (torch.std default: divisor = F - 1); eps added to std.
    var = jnp.sum(diff * diff, axis=-1, keepdims=True) / (feat - 1)
    s = jnp.sqrt(var) + EPS
    # Per-row reciprocal on the EUP (cheap (row_tile, 1) column) instead of an
    # F-wide divide; one Newton step restores full f32 accuracy.
    inv = pl.reciprocal(s, approx=True)
    inv = inv * (2.0 - s * inv)
    out = beta_ref[...] * (diff * inv) + gamma_ref[...]
    o_ref[...] = out.astype(o_ref.dtype)


def _choose_row_tile(rows, feat, in_itemsize, out_itemsize):
    """Largest row tile (multiple of 8, <= rows, <= 1024) fitting the budget."""
    if rows <= 8:
        return rows  # single full-extent block (always a legal block shape)
    # Per-row VMEM cost: double-buffered input + output tiles plus ~2 f32
    # working copies of the block used for the in-kernel f32 math.
    bytes_per_row = feat * (2 * in_itemsize + 2 * out_itemsize + 2 * 4)
    tile = _TILE_VMEM_BUDGET // max(bytes_per_row, 1)
    tile = max(8, min(tile, _MAX_ROW_TILE))
    tile = (tile // 8) * 8                 # sublane granularity
    tile = min(tile, (rows // 8) * 8)      # never exceed the array extent
    return max(tile, 8)


def layer_norm(x, beta, gamma, *, row_tile=None):
    """x: (B, L, F); beta, gamma: (F,). Returns (B, L, F)."""
    B, L, F = x.shape
    rows = B * L

    x2d = x.reshape(rows, F)
    beta2d = beta.reshape(1, F).astype(jnp.float32)
    gamma2d = gamma.reshape(1, F).astype(jnp.float32)

    if row_tile is None:
        row_tile = _choose_row_tile(rows, F, x.dtype.itemsize, x.dtype.itemsize)

    # TODO(synk): for F < 128 (lane-underutilized, masked stores), production
    # callers should use F as a multiple of 128 or pack rows into 128-lane slabs.
    grid = (pl.cdiv(rows, row_tile),)  # ragged last block handled by Pallas
    out2d = pl.pallas_call(
        _layernorm_kernel,
        out_shape=jax.ShapeDtypeStruct((rows, F), x.dtype),
        grid_spec=pltpu.PrefetchScalarGridSpec(
            num_scalar_prefetch=0,
            grid=grid,
            in_specs=[
                pl.BlockSpec((row_tile, F), lambda i: (i, 0)),
                pl.BlockSpec((1, F), lambda i: (0, 0)),
                pl.BlockSpec((1, F), lambda i: (0, 0)),
            ],
            out_specs=pl.BlockSpec((row_tile, F), lambda i: (i, 0)),
        ),
        compiler_params=pltpu.CompilerParams(
            dimension_semantics=("parallel",),
            vmem_limit_bytes=_VMEM_LIMIT_BYTES,
        ),
    )(x2d, beta2d, gamma2d)
    return out2d.reshape(B, L, F)


def _reference(x, beta, gamma):
    x32 = x.astype(jnp.float32)
    mean = jnp.mean(x32, axis=-1, keepdims=True)
    diff = x32 - mean
    var = jnp.sum(diff * diff, axis=-1, keepdims=True) / (x.shape[-1] - 1)
    std = jnp.sqrt(var)
    return (beta * diff / (std + EPS) + gamma).astype(x.dtype)


if __name__ == "__main__":
    B, L, F = 2, 8, 32
    key = jax.random.PRNGKey(0)
    kx, kb, kg = jax.random.split(key, 3)
    x = jax.random.normal(kx, (B, L, F), dtype=jnp.float32)

    # 1) Module-default parameters: beta = zeros (scale), gamma = ones (shift).
    beta0 = jnp.zeros((F,), dtype=jnp.float32)
    gamma0 = jnp.ones((F,), dtype=jnp.float32)
    out0 = jax.block_until_ready(layer_norm(x, beta0, gamma0))
    ref0 = _reference(x, beta0, gamma0)
    assert out0.shape == (B, L, F)
    assert jnp.max(jnp.abs(out0 - ref0)) < 1e-4

    # 2) Non-trivial parameters to exercise the full normalization path.
    beta1 = jax.random.normal(kb, (F,), dtype=jnp.float32)
    gamma1 = jax.random.normal(kg, (F,), dtype=jnp.float32)
    out1 = jax.block_until_ready(layer_norm(x, beta1, gamma1))
    ref1 = _reference(x, beta1, gamma1)
    assert jnp.max(jnp.abs(out1 - ref1)) < 1e-4

    print("KERNEL_OK")
</pallas_src>

<mosaic_0001>
module attributes {stable_mosaic.version = 11 : i64} {
  func.func @_layernorm_kernel(%arg0: i32, %arg1: memref<16x32xf32, #tpu.memory_space<vmem>>, %arg2: memref<1x32xf32, #tpu.memory_space<vmem>>, %arg3: memref<1x32xf32, #tpu.memory_space<vmem>>, %arg4: memref<16x32xf32, #tpu.memory_space<vmem>>) attributes {dimension_semantics = [#tpu.dimension_semantics<parallel>], iteration_bounds = array<i64: 1>, scalar_prefetch = 0 : i64, scratch_operands = 0 : i64, tpu.core_type = #tpu.core_type<tc>, window_params = [{transform_indices = @transform_0, window_bounds = array<i64: 16, 32>}, {pipeline_mode = #tpu.pipeline_mode<synchronous>, transform_indices = @transform_1, window_bounds = array<i64: 1, 32>}, {pipeline_mode = #tpu.pipeline_mode<synchronous>, transform_indices = @transform_2, window_bounds = array<i64: 1, 32>}, {transform_indices = @transform_3, window_bounds = array<i64: 16, 32>}]} {
    %c0 = arith.constant 0 : index
    %c0_0 = arith.constant 0 : index
    %0 = vector.load %arg1[%c0, %c0_0] : memref<16x32xf32, #tpu.memory_space<vmem>>, vector<16x32xf32>
    %cst = arith.constant dense<0.000000e+00> : vector<16xf32>
    %1 = vector.multi_reduction <add>, %0, %cst [1] : vector<16x32xf32> to vector<16xf32>
    %2 = vector.shape_cast %1 : vector<16xf32> to vector<16x1xf32>
    %cst_1 = arith.constant 3.200000e+01 : f32
    %3 = vector.broadcast %cst_1 : f32 to vector<16x1xf32>
    %4 = arith.divf %2, %3 : vector<16x1xf32>
    %5 = vector.broadcast %4 : vector<16x1xf32> to vector<16x32xf32>
    %6 = arith.subf %0, %5 : vector<16x32xf32>
    %7 = arith.mulf %6, %6 : vector<16x32xf32>
    %cst_2 = arith.constant dense<0.000000e+00> : vector<16xf32>
    %8 = vector.multi_reduction <add>, %7, %cst_2 [1] : vector<16x32xf32> to vector<16xf32>
    %9 = vector.shape_cast %8 : vector<16xf32> to vector<16x1xf32>
    %cst_3 = arith.constant 3.100000e+01 : f32
    %10 = vector.broadcast %cst_3 : f32 to vector<16x1xf32>
    %11 = arith.divf %9, %10 : vector<16x1xf32>
    %12 = math.sqrt %11 : vector<16x1xf32>
    %cst_4 = arith.constant 9.99999997E-7 : f32
    %13 = vector.broadcast %cst_4 : f32 to vector<16x1xf32>
    %14 = arith.addf %12, %13 : vector<16x1xf32>
    %15 = tpu.reciprocal %14 {approx = true} : vector<16x1xf32> -> vector<16x1xf32>
    %16 = arith.mulf %14, %15 : vector<16x1xf32>
    %cst_5 = arith.constant 2.000000e+00 : f32
    %17 = vector.broadcast %cst_5 : f32 to vector<16x1xf32>
    %18 = arith.subf %17, %16 : vector<16x1xf32>
    %19 = arith.mulf %15, %18 : vector<16x1xf32>
    %c0_6 = arith.constant 0 : index
    %c0_7 = arith.constant 0 : index
    %20 = vector.load %arg2[%c0_6, %c0_7] : memref<1x32xf32, #tpu.memory_space<vmem>>, vector<1x32xf32>
    %21 = vector.broadcast %19 : vector<16x1xf32> to vector<16x32xf32>
    %22 = arith.mulf %6, %21 : vector<16x32xf32>
    %23 = vector.broadcast %20 : vector<1x32xf32> to vector<16x32xf32>
    %24 = arith.mulf %23, %22 : vector<16x32xf32>
    %c0_8 = arith.constant 0 : index
    %c0_9 = arith.constant 0 : index
    %25 = vector.load %arg3[%c0_8, %c0_9] : memref<1x32xf32, #tpu.memory_space<vmem>>, vector<1x32xf32>
    %26 = vector.broadcast %25 : vector<1x32xf32> to vector<16x32xf32>
    %27 = arith.addf %24, %26 : vector<16x32xf32>
    %c0_10 = arith.constant 0 : index
    %c0_11 = arith.constant 0 : index
    %28 = vector.load %arg4[%c0_10, %c0_11] : memref<16x32xf32, #tpu.memory_space<vmem>>, vector<16x32xf32>
    tpu.vector_store %arg4[%c0_10, %c0_11], %27 {strides = array<i32>} : memref<16x32xf32, #tpu.memory_space<vmem>>, vector<16x32xf32>,
    return
  }
  func.func @transform_0(%arg0: i32) -> (i32, i32) {
    %c0_i32 = arith.constant 0 : i32
    %c0_i32_0 = arith.constant 0 : i32
    return %arg0, %c0_i32 : i32, i32
  }
  func.func @transform_1(%arg0: i32) -> (i32, i32) {
    %c0_i32 = arith.constant 0 : i32
    %c0_i32_0 = arith.constant 0 : i32
    %c0_i32_1 = arith.constant 0 : i32
    return %c0_i32, %c0_i32_0 : i32, i32
  }
  func.func @transform_2(%arg0: i32) -> (i32, i32) {
    %c0_i32 = arith.constant 0 : i32
    %c0_i32_0 = arith.constant 0 : i32
    %c0_i32_1 = arith.constant 0 : i32
    return %c0_i32, %c0_i32_0 : i32, i32
  }
  func.func @transform_3(%arg0: i32) -> (i32, i32) {
    %c0_i32 = arith.constant 0 : i32
    %c0_i32_0 = arith.constant 0 : i32
    return %arg0, %c0_i32 : i32, i32
  }
}

</mosaic_0001>

<llo_original>
// kernel: tpu_custom_call.1
$region0: #{tpu_custom_call.1}
  #allocation0 [shape = 'u32[]', space=smem, size = 0x4, offset = 0x4, fixed_abs, tag = 'smem constant byte address 0x4 - core index']
  #allocation1 [shape = 'u32[144,128]{1,0:T(1,128)}', space=vmem, size = 0x12000, scoped, tag = 'internal scratch']
  %s0 = inlined_call_operand.hbm [shape: f32[16,32], index: 0, kind: input, shape index: {}]
  %s1 = inlined_call_operand.vmem [shape: f32[1,32], index: 1, kind: input, shape index: {}]
  %s2 = inlined_call_operand.vmem [shape: f32[1,32], index: 2, kind: input, shape index: {}]
  %s3 = inlined_call_operand.hbm [shape: f32[16,32], index: 3, kind: output, shape index: {}]
  %s4 = sld [smem:[#allocation0]]
  $region26: #{tpu_custom_call.1} parent=0
    _
  %s6 = ssub.s32 1, %s4
  %s7 = scalar_select 0, %s6, %s4
  $region1: #{tpu_custom_call.1} parent=0
    #allocation2 [shape = 'u8[8192]{0}', space=vmem, size = 0x2000, scoped, tag = 'input window, operand 0, single buffered']
    #allocation3 [shape = 's32[1]{0}', space=sflag, size = 0x4, scoped, tag = 'scoped memory for tpu_custom_call.1']
    #allocation4 [shape = 's32[1]{0}', space=sflag, size = 0x4, scoped, tag = 'scoped memory for tpu_custom_call.1']
    #allocation5 [shape = 'u8[8192]{0}', space=vmem, size = 0x2000, scoped, tag = 'output window, operand 0, single buffered']
    %8 = vsyncpa [#allocation3], 0
    %9 = vsyncpa [#allocation4], 0
    // Predicated region
    $region2: #{tpu_custom_call.1} parent=1 // pred_check
      _
    $region3: #{tpu_custom_call.1} parent=1 // pred_check_branch
      %11 = sbr.rel (0) target = $region5
    $region4: #{tpu_custom_call.1} parent=1 // pred_region
      %s13 = ssub.s32 256, 256
      %14 = vsyncadd [#allocation3], %s13
      %s15 = sshll.u32 [#allocation2], 4
      %s16 = int_to_ptr.vmem [resolvable:$true] %s15
      %21 = dma.hbm_to_vmem [thread:$0]  %s0, 256, %s16, [#allocation3], 128, 128, 8
    $region5: #{tpu_custom_call.1} parent=1 // pred_fallthru
      _
    // Predicated region
    $region6: #{tpu_custom_call.1} parent=1 // pred_check
      _
    $region7: #{tpu_custom_call.1} parent=1 // pred_check_branch
      %23 = sbr.rel (0) target = $region9
    $region8: #{tpu_custom_call.1} parent=1 // pred_region
      _
    $region9: #{tpu_custom_call.1} parent=1 // pred_fallthru
      _
    // Predicated region
    $region10: #{tpu_custom_call.1} parent=1 // pred_check
      _
    $region11: #{tpu_custom_call.1} parent=1 // pred_check_branch
      %25 = sbr.rel (0) target = $region13
    $region12: #{tpu_custom_call.1} parent=1 // pred_region
      _
    $region13: #{tpu_custom_call.1} parent=1 // pred_fallthru
      _
    // Predicated region
    $region14: #{tpu_custom_call.1} parent=1 // pred_check
      _
    $region15: #{tpu_custom_call.1} parent=1 // pred_check_branch
      %27 = sbr.rel (0) target = $region17
    $region16: #{tpu_custom_call.1} parent=1 // pred_region
      %28 = dma.done [#allocation3], 256
    $region17: #{tpu_custom_call.1} parent=1 // pred_fallthru
      _
    %v29 = vld [vmem:[#allocation2] sm:$0xff]
    %v30 = vld [vmem:[#allocation2 + $0x8] sm:$0xff]
    %vm31 = vcmask 261120
    %v32 = vsel %vm31, %v29, 0.0
    %33 = vadd.xlane.f32.xlu0 %v32
    %v34 = vpop.xlane.xlu0 %33
    %v35 = vsel %vm31, %v30, 0.0
    %36 = vadd.xlane.f32.xlu0 %v35
    %v37 = vpop.xlane.xlu0 %36
    %v38 = vrcp.pop 32.0
    %v39 = vmul.f32 %v34, %v38
    %v40 = vmul.f32 %v37, %v38
    %v41 = vsub.f32 %v29, %v39
    %v42 = vsub.f32 %v30, %v40
    %v43 = vmul.f32 %v41, %v41
    %v44 = vmul.f32 %v42, %v42
    %v45 = vsel %vm31, %v43, 0.0
    %46 = vadd.xlane.f32.xlu0 %v45
    %v47 = vpop.xlane.xlu0 %46
    %v48 = vsel %vm31, %v44, 0.0
    %49 = vadd.xlane.f32.xlu0 %v48
    %v50 = vpop.xlane.xlu0 %49
    %v51 = vrcp.pop 31.0
    %v52 = vmul.f32 %v47, %v51
    %v53 = vmul.f32 %v50, %v51
    %v54 = vrsqrt.pop %v52
    %v55 = vmul.f32 %v52, %v54
    %vm56 = vcmp.eq.f32.partialorder %v52, inf
    %v57 = vsel %vm56, %v52, %v55
    %vm58 = vcmp.eq.f32.partialorder %v52, 0.0
    %v59 = vand.u32 %v52, 2147483648
    %v60 = vsel %vm58, %v59, %v57
    %v61 = vrsqrt.pop %v53
    %v62 = vmul.f32 %v53, %v61
    %vm63 = vcmp.eq.f32.partialorder %v53, inf
    %v64 = vsel %vm63, %v53, %v62
    %vm65 = vcmp.eq.f32.partialorder %v53, 0.0
    %v66 = vand.u32 %v53, 2147483648
    %v67 = vsel %vm65, %v66, %v64
    %v68 = vadd.f32 %v60, 1e-06
    %v69 = vadd.f32 %v67, 1e-06
    %v70 = vrcp.pop %v68
    %v71 = vrcp.pop %v69
    %v72 = vmul.f32 %v68, %v70
    %v73 = vmul.f32 %v69, %v71
    %v74 = vsub.f32 2.0, %v72
    %v75 = vsub.f32 2.0, %v73
    %v76 = vmul.f32 %v70, %v74
    %v77 = vmul.f32 %v71, %v75
    %v78 = vld [vmem:[%s1] sm:$0x1]
    %v79 = vmul.f32 %v41, %v76
    %v80 = vmul.f32 %v42, %v77
    %v82 = vlaneseq
    %v83 = vshrl.u32 %v82, 7
    %v84 = vsub.s32 0, %v83
    %v85 = vrot.slane %v78, %v84
    %v87 = vmul.f32 %v85, %v79
    %v88 = vmul.f32 %v85, %v80
    %v89 = vld [vmem:[%s2] sm:$0x1]
    %v91 = vlaneseq
    %v92 = vshrl.u32 %v91, 7
    %v93 = vsub.s32 0, %v92
    %v94 = vrot.slane %v89, %v93
    %v96 = vadd.f32 %v87, %v94
    %v97 = vadd.f32 %v88, %v94
    %98 = vst.msk [vmem:[#allocation5] sm:$0xff] %vm31, %v96
    %99 = vst.msk [vmem:[#allocation5 + $0x8] sm:$0xff] %vm31, %v97
    // Predicated region
    $region18: #{tpu_custom_call.1} parent=1 // pred_check
      _
    $region19: #{tpu_custom_call.1} parent=1 // pred_check_branch
      %101 = sbr.rel (0) target = $region21
    $region20: #{tpu_custom_call.1} parent=1 // pred_region
      %s103 = ssub.s32 256, 256
      %104 = vsyncadd [#allocation4], %s103
      %s105 = sshll.u32 [#allocation5], 4
      %s106 = int_to_ptr.vmem [resolvable:$true] %s105
      %111 = dma.vmem_to_hbm [thread:$0]  %s106, 256, %s3, [#allocation4], 128, 128, 8
    $region21: #{tpu_custom_call.1} parent=1 // pred_fallthru
      _
    // Predicated region
    $region22: #{tpu_custom_call.1} parent=1 // pred_check
      _
    $region23: #{tpu_custom_call.1} parent=1 // pred_check_branch
      %113 = sbr.rel (0) target = $region25
    $region24: #{tpu_custom_call.1} parent=1 // pred_region
      %114 = dma.done [#allocation4], 256
    $region25: #{tpu_custom_call.1} parent=1 // pred_fallthru
      _
    %115 = vsyncpa [#allocation3], 1
    %116 = vsyncpa [#allocation4], 1

</llo_original>
